<compile_context>
chip_gen: v7x
topology: tpu7x:2x2x1
jax: 0.10.0
libtpu: 0.0.40
codegen_flags: <defaults>
</compile_context>

<pallas_src>
import functools

import jax
import jax.numpy as jnp
from jax.experimental import pallas as pl
from jax.experimental.pallas import tpu as pltpu


def _attn_agg_kernel(*refs, use_mlp):
    """One batch tile of the aggregator.

    Ref layouts (f32 unless noted; x / W_mlp may be bf16 for HBM streaming):
      x_ref:    [TB, Gp, D_in]   member embeddings (stream dtype)
      mask_ref: [TB, Gp]         0 (present) / -inf (absent), f32, lane-dense
      wm_ref:   [D_in, D_out]    pre-transposed MLP weight (stream dtype)  [mlp only]
      bm_ref:   [1, D_out]       MLP bias, f32                              [mlp only]
      wa_ref:   [1, D_h]         attention weight as a lane-dense f32 row
      ba_ref:   [1]              attention bias, f32 scalar in SMEM
      out_ref:  [TB, D_h]        f32 output tile
    """
    if use_mlp:
        x_ref, mask_ref, wm_ref, bm_ref, wa_ref, ba_ref, out_ref = refs
    else:
        x_ref, mask_ref, wa_ref, ba_ref, out_ref = refs

    TB, Gp, D_in = x_ref.shape

    if use_mlp:
        # One big MXU matmul over all TB*Gp member rows against the
        # pre-transposed [D_in, D_out] weight (canonical [M,K]x[K,N]; no
        # per-step transpose of the resident weight). Gp is a multiple of 8
        # so the reshapes are layout-preserving (no VMEM relayout copy).
        x2d = x_ref[...].reshape(TB * Gp, D_in)
        pre = jnp.dot(x2d, wm_ref[...], preferred_element_type=jnp.float32)
        pre = pre + bm_ref[...]
        h = jnp.tanh(jnp.maximum(pre, 0.0)).reshape(TB, Gp, -1)   # [TB, Gp, D_out] f32
    else:
        h = x_ref[...].astype(jnp.float32)                        # [TB, Gp, D_in] f32

    # Attention scores: tanh(h . w_att + b_att) as a VPU broadcast-multiply +
    # XLU lane reduce (no degenerate N=1 MXU matmul, no [D_h, 1] weight tile).
    s = jnp.tanh(jnp.sum(h * wa_ref[...], axis=-1) + ba_ref[0])   # [TB, Gp]
    s = s + mask_ref[...]                                         # mask is 0 / -inf

    # Softmax over the group dimension. Note: a row whose mask is all -inf
    # yields NaN, exactly matching the PyTorch reference semantics.
    m = jnp.max(s, axis=1, keepdims=True)                         # [TB, 1]
    e = jnp.exp(s - m)                                            # [TB, Gp]
    w = e * pl.reciprocal(jnp.sum(e, axis=1, keepdims=True), approx=True)

    # Weighted aggregation: out[b, :] = sum_g h[b, g, :] * w[b, g]
    out_ref[...] = jnp.sum(h * w[:, :, None], axis=1).astype(out_ref.dtype)


def _vmem_limit_bytes():
    """Generation-aware scoped-VMEM limit (~3/4 of physical capacity)."""
    try:
        cap = int(pltpu.get_tpu_info().vmem_capacity_bytes)
    except Exception:
        cap = 64 * 1024 * 1024          # conservative (v7x-sized) fallback
    return max(16 * 1024 * 1024, (cap * 3) // 4)


def attention_aggregator(x, mask, params, *, mlp=False, batch_tile=None,
                         stream_dtype=jnp.bfloat16):
    """x: [B, G, D_in] f32, mask: [B, G] f32 (0 present / -inf absent).

    Returns [B, D_h] f32 with D_h = output_dim if mlp else input_dim.
    x and W_mlp are streamed from HBM in `stream_dtype` (default bf16, which
    halves the dominant HBM read); softmax / aggregation math is all f32.
    """
    x = jnp.asarray(x, jnp.float32)
    mask = jnp.asarray(mask, jnp.float32)
    B, G, D_in = x.shape

    w_mlp = jnp.asarray(params["w_mlp"], jnp.float32)     # [D_out, D_in]
    b_mlp = jnp.asarray(params["b_mlp"], jnp.float32)     # [D_out]
    w_att = jnp.asarray(params["w_att"], jnp.float32)     # [1, D_h]
    b_att = jnp.asarray(params["b_att"], jnp.float32)     # [1]
    D_out = w_mlp.shape[0]
    D_h = D_out if mlp else D_in
    assert w_att.shape[-1] == D_h, (
        f"attention weight width {w_att.shape[-1]} != feature dim {D_h} "
        f"(mlp={mlp}; the mlp=False path requires input_dim == output_dim)")
    if mlp:
        assert w_mlp.shape[1] == D_in

    stream_dtype = jnp.dtype(stream_dtype)
    item = stream_dtype.itemsize

    # --- pad G to a sublane multiple so the in-kernel reshapes are free ----
    Gp = ((G + 7) // 8) * 8
    x_s = x.astype(stream_dtype)
    if Gp != G:
        x_s = jnp.pad(x_s, ((0, 0), (0, Gp - G), (0, 0)))
        mask = jnp.pad(mask, ((0, 0), (0, Gp - G)), constant_values=-jnp.inf)

    # --- batch-tile sizing --------------------------------------------------
    vmem_limit = _vmem_limit_bytes()
    x_row = Gp * D_in * item                               # streamed x bytes / group
    if batch_tile is not None:
        tb = int(batch_tile)
    else:
        # Amortize DMA against the ~0.35us per-grid-step overhead: target a
        # ~4 MiB x tile per pipeline buffer, then clamp by VMEM, accounting
        # for double-buffered streams + f32 intermediates + resident weights.
        tb = max(1, (4 << 20) // max(1, x_row))
        stream_row = 2 * (x_row + Gp * 4 + D_h * 4)        # double-buffered in/out
        work_row = 4 * (Gp * D_h + (Gp * D_out if mlp else 0)
                        + Gp * D_in + 8 * Gp)              # f32 h / pre / score temps
        weights = (2 * (D_in * D_out * item + D_out * 4) if mlp else 0) \
            + 2 * D_h * 4 + 4096
        headroom = 2 << 20
        tb_cap = max(8, (vmem_limit - weights - headroom)
                     // max(1, stream_row + work_row))
        tb = min(tb, tb_cap)

    # Guarantee >= 2 grid steps for larger batches so both v7x TensorCores
    # get work under dimension_semantics=("parallel",).
    if B > 16:
        tb = min(tb, max(8, (((B + 1) // 2) + 7) // 8 * 8))

    if tb >= B:
        TB = B                                             # single tile == full batch
    else:
        TB = max(8, (tb // 8) * 8)                         # sublane-aligned tiles

    nb = pl.cdiv(B, TB)
    B_pad = nb * TB
    if B_pad != B:
        # Padded batch rows get mask == 0 (not -inf) so the in-kernel softmax
        # stays finite; they are sliced off below.
        x_s = jnp.pad(x_s, ((0, B_pad - B), (0, 0), (0, 0)))
        mask = jnp.pad(mask, ((0, B_pad - B), (0, 0)))

    # --- grid-invariant operands --------------------------------------------
    wm_t = w_mlp.T.astype(stream_dtype)                    # [D_in, D_out] pre-transposed
    bm = b_mlp.reshape(1, D_out)                           # [1, D_out] f32
    wa = w_att.reshape(1, D_h)                             # [1, D_h] lane-dense f32 row
    ba = b_att.reshape(1)                                  # [1] f32 -> SMEM scalar

    if mlp:
        weight_args = (wm_t, bm)
        weight_specs = [
            pl.BlockSpec((D_in, D_out), lambda b: (0, 0)),     # W_mlp^T (resident)
            pl.BlockSpec((1, D_out), lambda b: (0, 0)),        # b_mlp
        ]
    else:
        weight_args, weight_specs = (), []                 # skip MLP weights entirely

    kernel = functools.partial(_attn_agg_kernel, use_mlp=mlp)

    out = pl.pallas_call(
        kernel,
        out_shape=jax.ShapeDtypeStruct((B_pad, D_h), jnp.float32),
        grid=(nb,),
        in_specs=[
            pl.BlockSpec((TB, Gp, D_in), lambda b: (b, 0, 0)),     # x tile (stream dtype)
            pl.BlockSpec((TB, Gp), lambda b: (b, 0)),              # mask tile (f32)
            *weight_specs,
            pl.BlockSpec((1, D_h), lambda b: (0, 0)),              # w_att row
            pl.BlockSpec(memory_space=pltpu.MemorySpace.SMEM),     # b_att scalar (SMEM)
        ],
        out_specs=pl.BlockSpec((TB, D_h), lambda b: (b, 0)),
        compiler_params=pltpu.CompilerParams(
            dimension_semantics=("parallel",),                     # shard tiles across TCs
            vmem_limit_bytes=int(vmem_limit)),
    )(x_s, mask, *weight_args, wa, ba)

    return out[:B]


def _reference(x, mask, params, *, mlp=False, cast_dtype=None):
    """Pure-JAX reference matching the PyTorch forward.

    If cast_dtype is given, x and W_mlp are round-tripped through that dtype
    to mirror the kernel's HBM-streaming cast (math stays f32).
    """
    x = jnp.asarray(x, jnp.float32)
    w_mlp = jnp.asarray(params["w_mlp"], jnp.float32)
    if cast_dtype is not None:
        x = x.astype(cast_dtype).astype(jnp.float32)
        w_mlp = w_mlp.astype(cast_dtype).astype(jnp.float32)
    with jax.default_matmul_precision("float32"):
        if mlp:
            h = jnp.tanh(jax.nn.relu(x @ w_mlp.T + params["b_mlp"]))
        else:
            h = x
        att = jnp.tanh(h @ params["w_att"].T + params["b_att"])       # [B, G, 1]
        w = jax.nn.softmax(att + mask[:, :, None], axis=1)            # softmax over G
        return jnp.matmul(jnp.swapaxes(h, 1, 2), w)[..., 0]           # [B, D_h]


def _init_params(key, input_dim, output_dim):
    """Deterministic init mirroring the module's __init__ shapes."""
    k1, k2, k3 = jax.random.split(key, 3)
    # mlp linear: xavier_uniform_ weight, zero bias
    bound = (6.0 / (input_dim + output_dim)) ** 0.5
    w_mlp = jax.random.uniform(k1, (output_dim, input_dim), jnp.float32,
                               -bound, bound)
    b_mlp = jnp.zeros((output_dim,), jnp.float32)
    # attention linear (default torch init — just deterministic uniform here)
    abound = (1.0 / output_dim) ** 0.5
    w_att = jax.random.uniform(k2, (1, output_dim), jnp.float32, -abound, abound)
    b_att = jax.random.uniform(k3, (1,), jnp.float32, -abound, abound)
    return {"w_mlp": w_mlp, "b_mlp": b_mlp, "w_att": w_att, "b_att": b_att}


if __name__ == "__main__":
    key = jax.random.PRNGKey(0)
    kx, kp, kx2, kl2 = jax.random.split(key, 4)

    B, G, D = 2, 8, 32
    input_dim = output_dim = D            # mlp=False path requires in_dim == out_dim
    params = _init_params(kp, input_dim, output_dim)

    x = jax.random.normal(kx, (B, G, D), jnp.float32)
    lengths = jnp.array([5, 8], dtype=jnp.int32)
    member = jnp.arange(G)[None, :]
    mask = jnp.where(member < lengths[:, None], 0.0, -jnp.inf).astype(jnp.float32)

    # 1) Exact-semantics check: f32 streaming, single tile.
    for use_mlp in (False, True):
        out = jax.block_until_ready(
            attention_aggregator(x, mask, params, mlp=use_mlp,
                                 stream_dtype=jnp.float32))
        ref = _reference(x, mask, params, mlp=use_mlp)
        assert out.shape == (B, output_dim), out.shape
        err = float(jnp.max(jnp.abs(out - ref)))
        assert jnp.allclose(out, ref, atol=5e-3, rtol=5e-3), (
            f"f32 mismatch (mlp={use_mlp}): max abs err {err}")

    # 2) Production path: bf16 streaming, multi-step grid exercising batch
    #    padding (B=20 -> TB=16 x 2 steps by default, TB=8 x 3 steps when
    #    batch_tile=8) and group padding (G=6 -> Gp=8).
    B2, G2 = 20, 6
    x2 = jax.random.normal(kx2, (B2, G2, D), jnp.float32)
    lengths2 = jax.random.randint(kl2, (B2,), 1, G2 + 1)
    member2 = jnp.arange(G2)[None, :]
    mask2 = jnp.where(member2 < lengths2[:, None], 0.0,
                      -jnp.inf).astype(jnp.float32)
    for use_mlp in (False, True):
        ref2 = _reference(x2, mask2, params, mlp=use_mlp,
                          cast_dtype=jnp.bfloat16)
        for bt in (None, 8):
            out2 = jax.block_until_ready(
                attention_aggregator(x2, mask2, params, mlp=use_mlp,
                                     batch_tile=bt))
            assert out2.shape == (B2, output_dim), out2.shape
            err2 = float(jnp.max(jnp.abs(out2 - ref2)))
            assert jnp.allclose(out2, ref2, atol=2e-2, rtol=2e-2), (
                f"bf16 mismatch (mlp={use_mlp}, batch_tile={bt}): "
                f"max abs err {err2}")

    print("KERNEL_OK")
</pallas_src>

<mosaic_0001>
module attributes {stable_mosaic.version = 11 : i64} {
  func.func @_attn_agg_kernel(%arg0: i32, %arg1: memref<2x8x32xf32, #tpu.memory_space<vmem>>, %arg2: memref<2x8xf32, #tpu.memory_space<vmem>>, %arg3: memref<1x32xf32, #tpu.memory_space<vmem>>, %arg4: memref<1xf32, #tpu.memory_space<smem>>, %arg5: memref<2x32xf32, #tpu.memory_space<vmem>>) attributes {dimension_semantics = [#tpu.dimension_semantics<parallel>], iteration_bounds = array<i64: 1>, scalar_prefetch = 0 : i64, scratch_operands = 0 : i64, tpu.core_type = #tpu.core_type<tc>, window_params = [{transform_indices = @transform_0, window_bounds = array<i64: 2, 8, 32>}, {transform_indices = @transform_1, window_bounds = array<i64: 2, 8>}, {pipeline_mode = #tpu.pipeline_mode<synchronous>, transform_indices = @transform_2, window_bounds = array<i64: 1, 32>}, {transform_indices = @transform_3, window_bounds = array<i64: 1>}, {transform_indices = @transform_4, window_bounds = array<i64: 2, 32>}]} {
    %c0 = arith.constant 0 : index
    %c0_0 = arith.constant 0 : index
    %c0_1 = arith.constant 0 : index
    %0 = vector.load %arg1[%c0, %c0_0, %c0_1] : memref<2x8x32xf32, #tpu.memory_space<vmem>>, vector<2x8x32xf32>
    %c0_2 = arith.constant 0 : index
    %c0_3 = arith.constant 0 : index
    %1 = vector.load %arg3[%c0_2, %c0_3] : memref<1x32xf32, #tpu.memory_space<vmem>>, vector<1x32xf32>
    %2 = vector.shape_cast %1 : vector<1x32xf32> to vector<1x1x32xf32>
    %3 = vector.broadcast %2 : vector<1x1x32xf32> to vector<2x8x32xf32>
    %4 = arith.mulf %0, %3 : vector<2x8x32xf32>
    %cst = arith.constant dense<0.000000e+00> : vector<2x8xf32>
    %5 = vector.multi_reduction <add>, %4, %cst [2] : vector<2x8x32xf32> to vector<2x8xf32>
    %c0_4 = arith.constant 0 : index
    %6 = memref.load %arg4[%c0_4] : memref<1xf32, #tpu.memory_space<smem>>
    %7 = vector.broadcast %6 : f32 to vector<2x8xf32>
    %8 = arith.addf %5, %7 : vector<2x8xf32>
    %9 = math.tanh %8 : vector<2x8xf32>
    %c0_5 = arith.constant 0 : index
    %c0_6 = arith.constant 0 : index
    %10 = vector.load %arg2[%c0_5, %c0_6] : memref<2x8xf32, #tpu.memory_space<vmem>>, vector<2x8xf32>
    %11 = arith.addf %9, %10 : vector<2x8xf32>
    %cst_7 = arith.constant dense<0xFF800000> : vector<2xf32>
    %12 = vector.multi_reduction <maximumf>, %11, %cst_7 [1] : vector<2x8xf32> to vector<2xf32>
    %13 = vector.shape_cast %12 : vector<2xf32> to vector<2x1xf32>
    %14 = vector.broadcast %13 : vector<2x1xf32> to vector<2x8xf32>
    %15 = arith.subf %11, %14 : vector<2x8xf32>
    %16 = math.exp %15 : vector<2x8xf32>
    %cst_8 = arith.constant dense<0.000000e+00> : vector<2xf32>
    %17 = vector.multi_reduction <add>, %16, %cst_8 [1] : vector<2x8xf32> to vector<2xf32>
    %18 = vector.shape_cast %17 : vector<2xf32> to vector<2x1xf32>
    %19 = tpu.reciprocal %18 {approx = true} : vector<2x1xf32> -> vector<2x1xf32>
    %20 = vector.broadcast %19 : vector<2x1xf32> to vector<2x8xf32>
    %21 = arith.mulf %16, %20 : vector<2x8xf32>
    %22 = vector.shape_cast %21 : vector<2x8xf32> to vector<2x8x1xf32>
    %23 = vector.broadcast %22 : vector<2x8x1xf32> to vector<2x8x32xf32>
    %24 = arith.mulf %0, %23 : vector<2x8x32xf32>
    %cst_9 = arith.constant dense<0.000000e+00> : vector<2x32xf32>
    %25 = vector.multi_reduction <add>, %24, %cst_9 [1] : vector<2x8x32xf32> to vector<2x32xf32>
    %c0_10 = arith.constant 0 : index
    %c0_11 = arith.constant 0 : index
    %26 = vector.load %arg5[%c0_10, %c0_11] : memref<2x32xf32, #tpu.memory_space<vmem>>, vector<2x32xf32>
    tpu.vector_store %arg5[%c0_10, %c0_11], %25 {strides = array<i32>} : memref<2x32xf32, #tpu.memory_space<vmem>>, vector<2x32xf32>,
    return
  }
  func.func @transform_0(%arg0: i32) -> (i32, i32, i32) {
    %c0_i32 = arith.constant 0 : i32
    %c0_i32_0 = arith.constant 0 : i32
    %c0_i32_1 = arith.constant 0 : i32
    return %arg0, %c0_i32, %c0_i32_0 : i32, i32, i32
  }
  func.func @transform_1(%arg0: i32) -> (i32, i32) {
    %c0_i32 = arith.constant 0 : i32
    %c0_i32_0 = arith.constant 0 : i32
    return %arg0, %c0_i32 : i32, i32
  }
  func.func @transform_2(%arg0: i32) -> (i32, i32) {
    %c0_i32 = arith.constant 0 : i32
    %c0_i32_0 = arith.constant 0 : i32
    %c0_i32_1 = arith.constant 0 : i32
    return %c0_i32, %c0_i32_0 : i32, i32
  }
  func.func @transform_3(%arg0: i32) -> i32 {
    %c0_i32 = arith.constant 0 : i32
    %c0_i32_0 = arith.constant 0 : i32
    return %c0_i32 : i32
  }
  func.func @transform_4(%arg0: i32) -> (i32, i32) {
    %c0_i32 = arith.constant 0 : i32
    %c0_i32_0 = arith.constant 0 : i32
    return %arg0, %c0_i32 : i32, i32
  }
}

</mosaic_0001>

<llo_original>
// kernel: tpu_custom_call.1
$region0: #{tpu_custom_call.1}
  #allocation0 [shape = 'u32[]', space=smem, size = 0x4, offset = 0x4, fixed_abs, tag = 'smem constant byte address 0x4 - core index']
  #allocation1 [shape = 'u32[144,128]{1,0:T(1,128)}', space=vmem, size = 0x12000, scoped, tag = 'internal scratch']
  #allocation2 [shape = 'f32[1]{0:T(128)S(6)}', space=smem, size = 0x200, scoped, tag = 'scoped memory for tpu_custom_call.1']
  %s0 = inlined_call_operand.hbm [shape: f32[2,8,32], index: 0, kind: input, shape index: {}]
  %s1 = inlined_call_operand.vmem [shape: f32[2,8], index: 1, kind: input, shape index: {}]
  %s2 = inlined_call_operand.vmem [shape: f32[1,32], index: 2, kind: input, shape index: {}]
  %s3 = inlined_call_operand.<no memory space> [shape: f32[1], index: 3, kind: input, shape index: {}]
  %s4 = inlined_call_operand.hbm [shape: f32[2,32], index: 4, kind: output, shape index: {}]
  %s5 = sld [smem:[#allocation0]]
  $region30: #{tpu_custom_call.1} parent=0
    _
  %s7 = ssub.s32 1, %s5
  %s8 = scalar_select 0, %s7, %s5
  %9 = sst [smem:[#allocation2]] %s3
  $region1: #{tpu_custom_call.1} parent=0
    #allocation3 [shape = 'u8[8192]{0}', space=vmem, size = 0x2000, scoped, tag = 'input window, operand 0, single buffered']
    #allocation4 [shape = 's32[1]{0}', space=sflag, size = 0x4, scoped, tag = 'scoped memory for tpu_custom_call.1']
    #allocation5 [shape = 's32[1]{0}', space=sflag, size = 0x4, scoped, tag = 'scoped memory for tpu_custom_call.1']
    #allocation6 [shape = 'u8[1024]{0}', space=vmem, size = 0x400, scoped, tag = 'output window, operand 0, single buffered']
    %10 = vsyncpa [#allocation4], 0
    %11 = vsyncpa [#allocation5], 0
    // Predicated region
    $region2: #{tpu_custom_call.1} parent=1 // pred_check
      _
    $region3: #{tpu_custom_call.1} parent=1 // pred_check_branch
      %13 = sbr.rel (0) target = $region5
    $region4: #{tpu_custom_call.1} parent=1 // pred_region
      %s15 = ssub.s32 256, 256
      %16 = vsyncadd [#allocation4], %s15
      %s17 = sshll.u32 [#allocation3], 4
      %s18 = int_to_ptr.vmem [resolvable:$true] %s17
      %23 = dma.hbm_to_vmem [thread:$0]  %s0, 256, %s18, [#allocation4], 128, 128, 8
    $region5: #{tpu_custom_call.1} parent=1 // pred_fallthru
      _
    // Predicated region
    $region6: #{tpu_custom_call.1} parent=1 // pred_check
      _
    $region7: #{tpu_custom_call.1} parent=1 // pred_check_branch
      %25 = sbr.rel (0) target = $region9
    $region8: #{tpu_custom_call.1} parent=1 // pred_region
      _
    $region9: #{tpu_custom_call.1} parent=1 // pred_fallthru
      _
    // Predicated region
    $region10: #{tpu_custom_call.1} parent=1 // pred_check
      _
    $region11: #{tpu_custom_call.1} parent=1 // pred_check_branch
      %27 = sbr.rel (0) target = $region13
    $region12: #{tpu_custom_call.1} parent=1 // pred_region
      _
    $region13: #{tpu_custom_call.1} parent=1 // pred_fallthru
      _
    // Predicated region
    $region14: #{tpu_custom_call.1} parent=1 // pred_check
      _
    $region15: #{tpu_custom_call.1} parent=1 // pred_check_branch
      %29 = sbr.rel (0) target = $region17
    $region16: #{tpu_custom_call.1} parent=1 // pred_region
      _
    $region17: #{tpu_custom_call.1} parent=1 // pred_fallthru
      _
    // Predicated region
    $region18: #{tpu_custom_call.1} parent=1 // pred_check
      _
    $region19: #{tpu_custom_call.1} parent=1 // pred_check_branch
      %31 = sbr.rel (0) target = $region21
    $region20: #{tpu_custom_call.1} parent=1 // pred_region
      %32 = dma.done [#allocation4], 256
    $region21: #{tpu_custom_call.1} parent=1 // pred_fallthru
      _
    %v33 = vld [vmem:[#allocation3] sm:$0xff]
    %v34 = vld [vmem:[#allocation3 + $0x8] sm:$0xff]
    %v35 = vld [vmem:[%s2] sm:$0x1]
    %v37 = vlaneseq
    %v38 = vshrl.u32 %v37, 7
    %v39 = vsub.s32 0, %v38
    %v40 = vrot.slane %v35, %v39
    %v42 = vmul.f32 %v33, %v40
    %v43 = vmul.f32 %v34, %v40
    %vm44 = vcmask 261120
    %v45 = vsel %vm44, %v42, 0.0
    %46 = vadd.xlane.f32.xlu0 %v45
    %v47 = vpop.xlane.xlu0 %46
    %v48 = vsel %vm44, %v43, 0.0
    %49 = vadd.xlane.f32.xlu0 %v48
    %v50 = vpop.xlane.xlu0 %49
    %s51 = sld [smem:[#allocation2]]
    %v52 = vstv %s51
    %v53 = vadd.f32 %v47, %v52
    %v54 = vadd.f32 %v50, %v52
    %v55 = vtanh.pop %v53
    %v56 = vtanh.pop %v54
    %v57 = vld [vmem:[%s1] sm:$0x3]
    %v59 = vlaneseq
    %v60 = vshrl.u32 %v59, 7
    %v61 = vsub.s32 0, %v60
    %v62 = vrot.slane %v57, %v61
    %64 = vbcast.lane.b32.xlu0 %v62, 256
    %v65 = vpop.permute.xlu0 %64
    %v66 = vlaneseq
    %v67 = vshrl.u32 %v66, 7
    %v68 = vsub.s32 1, %v67
    %v69 = vrot.slane %v57, %v68
    %71 = vbcast.lane.b32.xlu0 %v69, 256
    %v72 = vpop.permute.xlu0 %71
    %v75 = vadd.f32 %v55, %v65
    %v76 = vadd.f32 %v56, %v72
    %79 = vset.pattern.permute.xlu0 0
    %80 = vperm.xlu0 %79, %v75
    %v81 = vpop.permute.xlu0 %80
    %82 = vset.pattern.permute.xlu0 0
    %83 = vperm.xlu0 %82, %v76
    %v84 = vpop.permute.xlu0 %83
    %v85 = vlaneseq
    %v86 = vand.u32 %v85, 127
    %v87 = vlaneseq
    %v88 = vshrl.u32 %v87, 7
    %v89 = vsub.s32 %v86, %v88
    %v90 = vrot.slane %v81, %v89
    %v91 = vlaneseq
    %v92 = vshrl.u32 %v91, 7
    %v93 = vsub.s32 %v86, %v92
    %v94 = vrot.slane %v84, %v93
    %vm95 = vcmask 1041409
    %v96 = vsel %vm95, %v94, %v90
    %vm98 = vcmask 58368
    %v99 = vsel %vm98, %v96, -inf
    %100 = vmax.xlane.f32.xlu0 %v99
    %v101 = vpop.xlane.xlu0 %100
    %v103 = vlaneseq
    %v104 = vshrl.u32 %v103, 7
    %v105 = vsub.s32 0, %v104
    %v106 = vrot.slane %v101, %v105
    %v107 = vlaneseq
    %v108 = vshrl.u32 %v107, 7
    %v109 = vsub.s32 1, %v108
    %v110 = vrot.slane %v101, %v109
    %v113 = vsub.f32 %v75, %v106
    %v114 = vsub.f32 %v76, %v110
    %v115 = vmul.f32 %v113, 1.442695
    %v116 = vpow.pop %v115
    %v117 = vmul.f32 %v114, 1.442695
    %v118 = vpow.pop %v117
    %121 = vset.pattern.permute.xlu0 0
    %122 = vperm.xlu0 %121, %v116
    %v123 = vpop.permute.xlu0 %122
    %124 = vset.pattern.permute.xlu0 0
    %125 = vperm.xlu0 %124, %v118
    %v126 = vpop.permute.xlu0 %125
    %v127 = vlaneseq
    %v128 = vshrl.u32 %v127, 7
    %v129 = vsub.s32 %v86, %v128
    %v130 = vrot.slane %v123, %v129
    %v131 = vlaneseq
    %v132 = vshrl.u32 %v131, 7
    %v133 = vsub.s32 %v86, %v132
    %v134 = vrot.slane %v126, %v133
    %v135 = vsel %vm95, %v134, %v130
    %v137 = vsel %vm98, %v135, 0.0
    %138 = vadd.xlane.f32.xlu0 %v137
    %v139 = vpop.xlane.xlu0 %138
    %v140 = vrcp.pop %v139
    %v142 = vlaneseq
    %v143 = vshrl.u32 %v142, 7
    %v144 = vsub.s32 0, %v143
    %v145 = vrot.slane %v140, %v144
    %v146 = vlaneseq
    %v147 = vshrl.u32 %v146, 7
    %v148 = vsub.s32 1, %v147
    %v149 = vrot.slane %v140, %v148
    %v152 = vmul.f32 %v116, %v145
    %v153 = vmul.f32 %v118, %v149
    %155 = vset.pattern.permute.xlu0 0
    %156 = vperm.xlu0 %155, %v152
    %v157 = vpop.permute.xlu0 %156
    %160 = vset.pattern.permute.xlu0 0
    %161 = vperm.xlu0 %160, %v153
    %v162 = vpop.permute.xlu0 %161
    %v164 = vmul.f32 %v33, %v157
    %v165 = vmul.f32 %v34, %v162
    %v166 = vsel %vm44, %v164, 0.0
    %v167 = vrot.slane %v166, 4
    %v168 = vadd.f32 %v166, %v167
    %v169 = vrot.slane %v168, 2
    %v170 = vadd.f32 %v168, %v169
    %v171 = vrot.slane %v170, 1
    %v172 = vadd.f32 %v170, %v171
    %v173 = vsel %vm44, %v165, 0.0
    %v174 = vrot.slane %v173, 4
    %v175 = vadd.f32 %v173, %v174
    %v176 = vrot.slane %v175, 2
    %v177 = vadd.f32 %v175, %v176
    %v178 = vrot.slane %v177, 1
    %v179 = vadd.f32 %v177, %v178
    %v182 = vsel %vm95, %v179, %v172
    %vm184 = vcmask 254976
    %185 = vst.msk [vmem:[#allocation6] sm:$0x3] %vm184, %v182
    // Predicated region
    $region22: #{tpu_custom_call.1} parent=1 // pred_check
      _
    $region23: #{tpu_custom_call.1} parent=1 // pred_check_branch
      %187 = sbr.rel (0) target = $region25
    $region24: #{tpu_custom_call.1} parent=1 // pred_region
      %s189 = ssub.s32 32, 32
      %190 = vsyncadd [#allocation5], %s189
      %s192 = sshll.u32 [#allocation6], 4
      %s193 = int_to_ptr.vmem [resolvable:$true] %s192
      %195 = dma.vmem_to_hbm [thread:$0]  %s193, 32, %s4, [#allocation5]
    $region25: #{tpu_custom_call.1} parent=1 // pred_fallthru
      _
    // Predicated region
    $region26: #{tpu_custom_call.1} parent=1 // pred_check
      _
    $region27: #{tpu_custom_call.1} parent=1 // pred_check_branch
      %197 = sbr.rel (0) target = $region29
    $region28: #{tpu_custom_call.1} parent=1 // pred_region
      %198 = dma.done [#allocation5], 32
    $region29: #{tpu_custom_call.1} parent=1 // pred_fallthru
      _
    %199 = vsyncpa [#allocation4], 1
    %200 = vsyncpa [#allocation5], 1

</llo_original>
